<compile_context>
chip_gen: v6e
topology: v6e:2x2x1
jax: 0.10.0
libtpu: 0.0.40
codegen_flags: <defaults>
</compile_context>

<pallas_src>
import math
from functools import partial

import jax
import jax.numpy as jnp
from jax import lax
from jax.experimental import pallas as pl
from jax.experimental.pallas import tpu as pltpu


def _round_up(x, m):
    return (x + m - 1) // m * m


def _device_tuning():
    """(tn_max, vmem_budget_bytes, vmem_limit_bytes) per TPU generation."""
    try:
        kind = jax.devices()[0].device_kind.lower()
    except Exception:
        kind = ""
    if "v5" in kind or "v6" in kind:
        # 128 MiB physical VMEM: big token tiles, raise the scoped limit.
        return 2048, 60 << 20, 96 << 20
    # v7x (64 MiB physical / 32 MiB scoped default) and unknown chips.
    return 1024, 24 << 20, 48 << 20


def _pick_tn(N, Kp, Ep, tn_max, vmem_budget):
    """Largest token tile (multiple of 16) that fits the VMEM budget and keeps
    >= 2 grid steps (so both v7x TensorCores get work)."""
    per_tok = 2 * (Kp * 2) + 2 * (Ep * 2)            # 2x-buffered bf16 patch + bf16 out rows
    resident = 2 * (Kp * Ep * 2) + 2 * (3 * Ep * 4)  # 2x-buffered weight + packed params
    avail = max(vmem_budget - resident, 16 * per_tok)
    tn = min(tn_max, avail // per_tok)
    if N > 16:
        tn = min(tn, _round_up((N + 1) // 2, 16))    # guarantee >= 2 grid steps
    tn = min(tn, _round_up(N, 16))
    tn = max(16, (tn // 16) * 16)
    return int(tn)


# --------------------------- Pallas kernel ----------------------------------

def _make_patch_embed_kernel(e_true, e_pad):
    """Fused (patches @ W + b) -> LayerNorm kernel.

    e_true: real embed_dim; e_pad: lane-padded embed dim (multiple of 128).
    Padded weight columns / bias / gamma / beta are zero, so y in the padded
    lanes is exactly 0.  mean therefore needs no mask, and the variance uses
    the exact identity  sum_all((y-mean)^2) = sum_true((y-mean)^2) + n_pad*mean^2.
    """
    inv_e = 1.0 / float(e_true)
    n_pad = float(e_pad - e_true)
    eps = 1e-5  # torch.nn.LayerNorm default

    def kernel(p_ref, w_ref, prm_ref, o_ref):
        # p_ref: (tn, Kp) bf16 | w_ref: (Kp, Ep) bf16 | prm_ref: (3, Ep) f32
        # o_ref: (tn, Ep) bf16
        y = jnp.dot(p_ref[...], w_ref[...],
                    preferred_element_type=jnp.float32)       # f32 accumulate
        y = y + prm_ref[0:1, :]                                # conv bias
        mean = jnp.sum(y, axis=-1, keepdims=True) * inv_e      # padded lanes are 0
        diff = y - mean
        ssq = jnp.sum(diff * diff, axis=-1, keepdims=True)
        var = (ssq - n_pad * (mean * mean)) * inv_e            # exact, mask-free
        y_hat = diff * lax.rsqrt(var + eps)
        out = y_hat * prm_ref[1:2, :] + prm_ref[2:3, :]        # gamma, beta
        o_ref[...] = out.astype(o_ref.dtype)

    return kernel


def _patch_embed_matmul_ln(patches_p, w_p, prm_p, *, e_true, tn, vmem_limit):
    """patches_p: (Np, Kp) bf16, w_p: (Kp, Ep) bf16, prm_p: (3, Ep) f32."""
    Np, Kp = patches_p.shape
    Ep = w_p.shape[1]
    kernel = _make_patch_embed_kernel(e_true, Ep)
    flops = 2 * Np * Kp * Ep
    bytes_accessed = Np * Kp * 2 + Kp * Ep * 2 + 3 * Ep * 4 + Np * Ep * 2
    return pl.pallas_call(
        kernel,
        out_shape=jax.ShapeDtypeStruct((Np, Ep), jnp.bfloat16),
        grid_spec=pltpu.PrefetchScalarGridSpec(
            num_scalar_prefetch=0,
            grid=(Np // tn,),
            in_specs=[
                pl.BlockSpec((tn, Kp), lambda i: (i, 0)),   # patch tile (pipelined)
                pl.BlockSpec((Kp, Ep), lambda i: (0, 0)),   # weight (resident)
                pl.BlockSpec((3, Ep), lambda i: (0, 0)),    # bias/gamma/beta (resident)
            ],
            out_specs=pl.BlockSpec((tn, Ep), lambda i: (i, 0)),
        ),
        compiler_params=pltpu.CompilerParams(
            dimension_semantics=("parallel",),              # shards over TCs on v7x
            vmem_limit_bytes=int(vmem_limit),
            allow_input_fusion=[True, False, False],        # fuse im2col/pad producer
        ),
        cost_estimate=pl.CostEstimate(
            flops=int(flops), transcendentals=int(Np),
            bytes_accessed=int(bytes_accessed)),
    )(patches_p, w_p, prm_p)


# ------------------------------ Glue -----------------------------------------

def _im2col(x, kh, kw, stride, pad):
    """x: (B, C, H, W) -> bf16 patches (B*Ho*Wo, C*kh*kw) in PyTorch (C,KH,KW) order."""
    B, C, H, W = x.shape
    x = x.astype(jnp.bfloat16)  # cast BEFORE the KH*KW expansion: halves im2col traffic
    xp = jnp.pad(x, ((0, 0), (0, 0), (pad, pad), (pad, pad)))
    Ho = (H + 2 * pad - kh) // stride + 1
    Wo = (W + 2 * pad - kw) // stride + 1
    cols = []
    for i in range(kh):
        for j in range(kw):
            cols.append(xp[:, :, i:i + stride * Ho:stride, j:j + stride * Wo:stride])
    stk = jnp.stack(cols, axis=0)                  # (KH*KW, B, C, Ho, Wo)
    stk = jnp.transpose(stk, (1, 3, 4, 2, 0))      # (B, Ho, Wo, C, KH*KW)
    patches = stk.reshape(B * Ho * Wo, C * kh * kw)
    return patches, Ho, Wo


@partial(jax.jit, static_argnames=("patch_size", "stride", "e_true",
                                   "tn_max", "vmem_budget", "vmem_limit"))
def _forward(x, w_p, prm_p, *, patch_size, stride, e_true,
             tn_max, vmem_budget, vmem_limit):
    B = x.shape[0]
    pad = patch_size // 2
    patches, Ho, Wo = _im2col(x, patch_size, patch_size, stride, pad)
    N, K = patches.shape
    Kp, Ep = w_p.shape

    tn = _pick_tn(N, Kp, Ep, tn_max, vmem_budget)
    Np = _round_up(N, tn)

    # Single padded bf16 materialization at the pallas_call boundary (the pad
    # fuses with the im2col transpose; allow_input_fusion lets XLA pull it
    # into the custom call).
    patches_p = jnp.pad(patches, ((0, Np - N), (0, Kp - K)))

    out = _patch_embed_matmul_ln(patches_p, w_p, prm_p,
                                 e_true=e_true, tn=tn, vmem_limit=vmem_limit)
    out = out[:N, :e_true].reshape(B, Ho * Wo, e_true)   # bf16
    return out


class OverlapPatchEmbedPallas:
    def __init__(self, key, patch_size=7, stride=4, in_chans=3, embed_dim=768):
        self.patch_size = patch_size
        self.stride = stride
        self.in_chans = in_chans
        self.embed_dim = embed_dim
        self._tn_max, self._vmem_budget, self._vmem_limit = _device_tuning()

        # Conv2d init: normal(0, sqrt(2/fan_out)), fan_out = kh*kw*out_ch
        fan_out = patch_size * patch_size * embed_dim
        std = math.sqrt(2.0 / fan_out)
        # PyTorch conv weight layout (E, C, KH, KW)
        self.conv_w = std * jax.random.normal(
            key, (embed_dim, in_chans, patch_size, patch_size), dtype=jnp.float32)
        self.conv_b = jnp.zeros((embed_dim,), jnp.float32)
        self.ln_w = jnp.ones((embed_dim,), jnp.float32)
        self.ln_b = jnp.zeros((embed_dim,), jnp.float32)

        # Cached, lane-padded parameters (done once, not per forward).
        K = in_chans * patch_size * patch_size
        Kp = _round_up(K, 128)
        Ep = _round_up(embed_dim, 128)
        w_mat = self.conv_w.reshape(embed_dim, K).T                  # (K, E)
        self._w_p = jnp.pad(
            w_mat, ((0, Kp - K), (0, Ep - embed_dim))).astype(jnp.bfloat16)
        pad_e = Ep - embed_dim
        self._prm_p = jnp.stack([                                    # (3, Ep) f32
            jnp.pad(self.conv_b, (0, pad_e)),
            jnp.pad(self.ln_w, (0, pad_e)),
            jnp.pad(self.ln_b, (0, pad_e)),
        ], axis=0)

    def __call__(self, x):
        # x: (B, C, H, W).  Output tokens are bfloat16 (f32 accumulation / LN math).
        _, _, H, W = x.shape
        pad = self.patch_size // 2
        Ho = (H + 2 * pad - self.patch_size) // self.stride + 1
        Wo = (W + 2 * pad - self.patch_size) // self.stride + 1
        out = _forward(x, self._w_p, self._prm_p,
                       patch_size=self.patch_size, stride=self.stride,
                       e_true=self.embed_dim, tn_max=self._tn_max,
                       vmem_budget=self._vmem_budget, vmem_limit=self._vmem_limit)
        return out, Ho, Wo


# --------------------------- Reference (plain JAX) ----------------------------

def _reference(x, conv_w, conv_b, ln_w, ln_b, stride, pad):
    y = lax.conv_general_dilated(
        x, conv_w, window_strides=(stride, stride),
        padding=((pad, pad), (pad, pad)),
        dimension_numbers=("NCHW", "OIHW", "NCHW"))
    y = y + conv_b[None, :, None, None]
    B, E, Ho, Wo = y.shape
    t = jnp.transpose(y.reshape(B, E, Ho * Wo), (0, 2, 1))
    mean = jnp.mean(t, axis=-1, keepdims=True)
    var = jnp.mean(jnp.square(t - mean), axis=-1, keepdims=True)
    t = (t - mean) * lax.rsqrt(var + 1e-5) * ln_w + ln_b
    return t, Ho, Wo


# ------------------------------- Main -----------------------------------------

if __name__ == "__main__":
    key = jax.random.PRNGKey(0)
    k_w, k_x = jax.random.split(key)

    B, C, H, W = 2, 4, 16, 16
    patch_size, stride, embed_dim = 7, 4, 32

    mod = OverlapPatchEmbedPallas(k_w, patch_size=patch_size, stride=stride,
                                  in_chans=C, embed_dim=embed_dim)
    x = jax.random.normal(k_x, (B, C, H, W), dtype=jnp.float32)

    out, Ho, Wo = mod(x)
    out = jax.block_until_ready(out)

    ref, Hr, Wr = _reference(x, mod.conv_w, mod.conv_b, mod.ln_w, mod.ln_b,
                             stride, patch_size // 2)
    assert (Ho, Wo) == (Hr, Wr)
    assert out.shape == (B, Ho * Wo, embed_dim)

    # bf16 MXU inputs + bf16 output store (f32 accumulate / f32 LayerNorm math)
    # vs pure-f32 reference.
    err = jnp.abs(out.astype(jnp.float32) - ref)
    assert jnp.max(err) < 1e-1, float(jnp.max(err))
    assert jnp.mean(err) < 1e-2, float(jnp.mean(err))

    print("KERNEL_OK")
</pallas_src>

<mosaic_0001>
module attributes {stable_mosaic.version = 11 : i64} {
  func.func @kernel(%arg0: i32, %arg1: memref<16x256xbf16, #tpu.memory_space<vmem>>, %arg2: memref<256x128xbf16, #tpu.memory_space<vmem>>, %arg3: memref<3x128xf32, #tpu.memory_space<vmem>>, %arg4: memref<16x128xbf16, #tpu.memory_space<vmem>>) attributes {dimension_semantics = [#tpu.dimension_semantics<parallel>], iteration_bounds = array<i64: 2>, scalar_prefetch = 0 : i64, scratch_operands = 0 : i64, tpu.core_type = #tpu.core_type<tc>, window_params = [{transform_indices = @transform_0, window_bounds = array<i64: 16, 256>}, {pipeline_mode = #tpu.pipeline_mode<synchronous>, transform_indices = @transform_1, window_bounds = array<i64: 256, 128>}, {pipeline_mode = #tpu.pipeline_mode<synchronous>, transform_indices = @transform_2, window_bounds = array<i64: 3, 128>}, {transform_indices = @transform_3, window_bounds = array<i64: 16, 128>}]} {
    %c0 = arith.constant 0 : index
    %c0_0 = arith.constant 0 : index
    %0 = vector.load %arg1[%c0, %c0_0] : memref<16x256xbf16, #tpu.memory_space<vmem>>, vector<16x256xbf16>
    %c0_1 = arith.constant 0 : index
    %c0_2 = arith.constant 0 : index
    %1 = vector.load %arg2[%c0_1, %c0_2] : memref<256x128xbf16, #tpu.memory_space<vmem>>, vector<256x128xbf16>
    %cst = arith.constant dense<0.000000e+00> : vector<16x128xf32>
    %2 = tpu.matmul %0, %1, %cst {dimension_numbers = #tpu.dot_dimension_numbers<[1], [0], [0], [1], [0, 0, 1, 1], [], []>} : vector<16x256xbf16>, vector<256x128xbf16>, vector<16x128xf32> -> vector<16x128xf32>
    %c0_3 = arith.constant 0 : index
    %c0_4 = arith.constant 0 : index
    %3 = vector.load %arg3[%c0_3, %c0_4] : memref<3x128xf32, #tpu.memory_space<vmem>>, vector<1x128xf32>
    %4 = vector.broadcast %3 : vector<1x128xf32> to vector<16x128xf32>
    %5 = arith.addf %2, %4 : vector<16x128xf32>
    %cst_5 = arith.constant dense<0.000000e+00> : vector<16xf32>
    %6 = vector.multi_reduction <add>, %5, %cst_5 [1] : vector<16x128xf32> to vector<16xf32>
    %7 = vector.shape_cast %6 : vector<16xf32> to vector<16x1xf32>
    %cst_6 = arith.constant 3.125000e-02 : f32
    %8 = vector.broadcast %cst_6 : f32 to vector<16x1xf32>
    %9 = arith.mulf %7, %8 : vector<16x1xf32>
    %10 = vector.broadcast %9 : vector<16x1xf32> to vector<16x128xf32>
    %11 = arith.subf %5, %10 : vector<16x128xf32>
    %12 = arith.mulf %11, %11 : vector<16x128xf32>
    %cst_7 = arith.constant dense<0.000000e+00> : vector<16xf32>
    %13 = vector.multi_reduction <add>, %12, %cst_7 [1] : vector<16x128xf32> to vector<16xf32>
    %14 = vector.shape_cast %13 : vector<16xf32> to vector<16x1xf32>
    %15 = arith.mulf %9, %9 : vector<16x1xf32>
    %cst_8 = arith.constant 9.600000e+01 : f32
    %16 = vector.broadcast %cst_8 : f32 to vector<16x1xf32>
    %17 = arith.mulf %16, %15 : vector<16x1xf32>
    %18 = arith.subf %14, %17 : vector<16x1xf32>
    %cst_9 = arith.constant 3.125000e-02 : f32
    %19 = vector.broadcast %cst_9 : f32 to vector<16x1xf32>
    %20 = arith.mulf %18, %19 : vector<16x1xf32>
    %cst_10 = arith.constant 9.99999974E-6 : f32
    %21 = vector.broadcast %cst_10 : f32 to vector<16x1xf32>
    %22 = arith.addf %20, %21 : vector<16x1xf32>
    %23 = math.rsqrt %22 : vector<16x1xf32>
    %24 = vector.broadcast %23 : vector<16x1xf32> to vector<16x128xf32>
    %25 = arith.mulf %11, %24 : vector<16x128xf32>
    %c1 = arith.constant 1 : index
    %c0_11 = arith.constant 0 : index
    %26 = vector.load %arg3[%c1, %c0_11] : memref<3x128xf32, #tpu.memory_space<vmem>>, vector<1x128xf32>
    %27 = vector.broadcast %26 : vector<1x128xf32> to vector<16x128xf32>
    %28 = arith.mulf %25, %27 : vector<16x128xf32>
    %c2 = arith.constant 2 : index
    %c0_12 = arith.constant 0 : index
    %29 = vector.load %arg3[%c2, %c0_12] : memref<3x128xf32, #tpu.memory_space<vmem>>, vector<1x128xf32>
    %30 = vector.broadcast %29 : vector<1x128xf32> to vector<16x128xf32>
    %31 = arith.addf %28, %30 : vector<16x128xf32>
    %32 = arith.truncf %31 : vector<16x128xf32> to vector<16x128xbf16>
    %c0_13 = arith.constant 0 : index
    %c0_14 = arith.constant 0 : index
    %33 = vector.load %arg4[%c0_13, %c0_14] : memref<16x128xbf16, #tpu.memory_space<vmem>>, vector<16x128xbf16>
    tpu.vector_store %arg4[%c0_13, %c0_14], %32 {strides = array<i32>} : memref<16x128xbf16, #tpu.memory_space<vmem>>, vector<16x128xbf16>,
    return
  }
  func.func @transform_0(%arg0: i32) -> (i32, i32) {
    %c0_i32 = arith.constant 0 : i32
    %c0_i32_0 = arith.constant 0 : i32
    return %arg0, %c0_i32 : i32, i32
  }
  func.func @transform_1(%arg0: i32) -> (i32, i32) {
    %c0_i32 = arith.constant 0 : i32
    %c0_i32_0 = arith.constant 0 : i32
    %c0_i32_1 = arith.constant 0 : i32
    return %c0_i32, %c0_i32_0 : i32, i32
  }
  func.func @transform_2(%arg0: i32) -> (i32, i32) {
    %c0_i32 = arith.constant 0 : i32
    %c0_i32_0 = arith.constant 0 : i32
    %c0_i32_1 = arith.constant 0 : i32
    return %c0_i32, %c0_i32_0 : i32, i32
  }
  func.func @transform_3(%arg0: i32) -> (i32, i32) {
    %c0_i32 = arith.constant 0 : i32
    %c0_i32_0 = arith.constant 0 : i32
    return %arg0, %c0_i32 : i32, i32
  }
}

</mosaic_0001>

<llo_original>
// kernel: _forward.2
$region0: #{_forward.2}
  #allocation0 [shape = 'u32[]', space=smem, size = 0x4, offset = 0x4, fixed_abs, tag = 'smem constant byte address 0x4 - core index']
  #allocation1 [shape = 'u32[144,128]{1,0:T(1,128)}', space=vmem, size = 0x12000, scoped, tag = 'internal scratch']
  #allocation2 [shape = 'u32[2048]{0}', space=vmem, size = 0x2000, scoped, tag = 'scoped memory for _forward.2']
  #allocation3 [shape = 'u32[2048]{0}', space=vmem, size = 0x2000, scoped, tag = 'scoped memory for _forward.2']
  #allocation4 [shape = 'u32[2048]{0}', space=vmem, size = 0x2000, scoped, tag = 'scoped memory for _forward.2']
  #allocation5 [shape = 'u32[2048]{0}', space=vmem, size = 0x2000, scoped, tag = 'scoped memory for _forward.2']
  #allocation6 [shape = 'u32[2048]{0}', space=vmem, size = 0x2000, scoped, tag = 'scoped memory for _forward.2']
  %s0 = inlined_call_operand.vmem [shape: bf16[256,128], index: 0, kind: input, shape index: {}]
  %s1 = inlined_call_operand.vmem [shape: f32[3,128], index: 1, kind: input, shape index: {}]
  %s2 = inlined_call_operand.vmem [shape: bf16[32,196], index: 2, kind: input, shape index: {}]
  %s3 = inlined_call_operand.<no memory space> [shape: bf16[], index: 3, kind: input, shape index: {}]
  %s4 = inlined_call_operand.hbm [shape: bf16[32,128], index: 4, kind: output, shape index: {}]
  %s5 = sld [smem:[#allocation0]]
  $region45: #{_forward.2} parent=0
    _
  %s7 = ssub.s32 1, %s5
  %s8 = scalar_select 0, %s7, %s5
  %v9 = vstv %s3
  %v10 = vunpack.i.l.bf16 %v9
  %v12 = vunpack.i.h.bf16 %v9
  $region1: #{_forward.2} parent=0
    #allocation7 [shape = 'u8[8192]{0}', space=vmem, size = 0x2000, scoped, tag = 'output window, operand 0']
    #allocation8 [shape = 's32[2]{0}', space=sflag, size = 0x8, scoped, tag = 'scoped memory for _forward.2']
    %14 = vsyncpa [#allocation8], 0
    %s15 = scalar_lea.sflag [#allocation8], 1
    %16 = vsyncpa %s15, 0
    loop: start=0, step=1, limit=4
    $region2: #{_forward.2} parent=1 // loop_pre_header
      _
    $region3: #{_forward.2} parent=1 // loop_header
      %s18 = sphi 0, %s22
      %p19 = scmp.ge.s32.totalorder %s18, 4
      %s28 = sphi 0, %s30
      %s31 = sphi 0, %s28
      %s32 = sphi 0, %s31
      %s48 = sphi 0, %s32
      %s52 = sphi 0, %s52
      %s54 = sphi 0, %s52
      %s55 = sphi 0, %s54
      %s69 = sphi 0, %s55
      %s73 = sphi 0, %s73
      %s75 = sphi 0, %s73
      %s76 = sphi 0, %s75
      %s90 = sphi 0, %s76
      %s96 = sphi 0, %s98
      %s99 = sphi 0, %s96
      %s100 = sphi 0, %s99
      %s116 = sphi 0, %s100
    $region4: #{_forward.2} parent=1 // loop_header_branch
      %21 = sbr.rel (%p19) target = $region8
    $region5: #{_forward.2} parent=1 // loop_body
      %s23 = ssub.s32 %s18, 1
      %s24 = ssub.s32 %s18, 2
      %s25 = sadd.s32 %s18, 1
      %s26 = ssub.s32 %s18, %s25
      %p27 = scmp.eq.s32.totalorder %s26, 0
      %s29 = sadd.s32 %s28, 1
      %s30 = scalar_select %p27, %s28, %s29
      %p33 = pneg %p27
      %p34 = scmp.eq.s32.totalorder %s18, 1
      %p35 = por %p33, %p34
      %p36 = scmp.ne.s32.totalorder %s28, %s31
      %p37 = scmp.eq.s32.totalorder %s18, 0
      %p38 = por %p36, %p37
      %p39 = scmp.ne.s32.totalorder %s28, %s31
      %p40 = scmp.eq.s32.totalorder %s23, 1
      %p41 = por %p39, %p40
      %p42 = scmp.ne.s32.totalorder %s31, %s32
      %p43 = scmp.eq.s32.totalorder %s23, 0
      %p44 = por %p42, %p43
      %p45 = scmp.ne.s32.totalorder %s31, %s32
      %p46 = scmp.eq.s32.totalorder %s24, 1
      %p47 = por %p45, %p46
      %p49 = scmp.ne.s32.totalorder %s32, %s48
      %p50 = scmp.eq.s32.totalorder %s24, 0
      %p51 = por %p49, %p50
      %s53 = sadd.s32 %s52, 1
      %p56 = scmp.eq.s32.totalorder %s18, 1
      %p57 = scmp.ne.s32.totalorder %s52, %s54
      %p58 = scmp.eq.s32.totalorder %s18, 0
      %p59 = por %p57, %p58
      %p60 = scmp.ne.s32.totalorder %s52, %s54
      %p61 = scmp.eq.s32.totalorder %s23, 1
      %p62 = por %p60, %p61
      %p63 = scmp.ne.s32.totalorder %s54, %s55
      %p64 = scmp.eq.s32.totalorder %s23, 0
      %p65 = por %p63, %p64
      %p66 = scmp.ne.s32.totalorder %s54, %s55
      %p67 = scmp.eq.s32.totalorder %s24, 1
      %p68 = por %p66, %p67
      %p70 = scmp.ne.s32.totalorder %s55, %s69
      %p71 = scmp.eq.s32.totalorder %s24, 0
      %p72 = por %p70, %p71
      %s74 = sadd.s32 %s73, 1
      %p77 = scmp.eq.s32.totalorder %s18, 1
      %p78 = scmp.ne.s32.totalorder %s73, %s75
      %p79 = scmp.eq.s32.totalorder %s18, 0
      %p80 = por %p78, %p79
      %p81 = scmp.ne.s32.totalorder %s73, %s75
      %p82 = scmp.eq.s32.totalorder %s23, 1
      %p83 = por %p81, %p82
      %p84 = scmp.ne.s32.totalorder %s75, %s76
      %p85 = scmp.eq.s32.totalorder %s23, 0
      %p86 = por %p84, %p85
      %p87 = scmp.ne.s32.totalorder %s75, %s76
      %p88 = scmp.eq.s32.totalorder %s24, 1
      %p89 = por %p87, %p88
      %p91 = scmp.ne.s32.totalorder %s76, %s90
      %p92 = scmp.eq.s32.totalorder %s24, 0
      %p93 = por %p91, %p92
      %s94 = ssub.s32 %s18, %s25
      %p95 = scmp.eq.s32.totalorder %s94, 0
      %s97 = sadd.s32 %s96, 1
      %s98 = scalar_select %p95, %s96, %s97
      %p101 = pneg %p95
      %p102 = scmp.eq.s32.totalorder %s18, 1
      %p103 = por %p101, %p102
      %p104 = scmp.ne.s32.totalorder %s96, %s99
      %p105 = scmp.eq.s32.totalorder %s18, 0
      %p106 = por %p104, %p105
      %p107 = scmp.ne.s32.totalorder %s96, %s99
      %p108 = scmp.eq.s32.totalorder %s23, 1
      %p109 = por %p107, %p108
      %p110 = scmp.ne.s32.totalorder %s99, %s100
      %p111 = scmp.eq.s32.totalorder %s23, 0
      %p112 = por %p110, %p111
      %p113 = scmp.ne.s32.totalorder %s99, %s100
      %p114 = scmp.eq.s32.totalorder %s24, 1
      %p115 = por %p113, %p114
      %p117 = scmp.ne.s32.totalorder %s100, %s116
      %p118 = scmp.eq.s32.totalorder %s24, 0
      %p119 = por %p117, %p118
      %p120 = scmp.le.s32.totalorder 1, %s18
      %p121 = scmp.lt.s32.totalorder %s18, 3
      %p122 = pnand %p120, %p121
      %p123 = pneg %p122
      // Predicated region
      $region9: #{_forward.2} parent=5 // pred_check
        _
      $region10: #{_forward.2} parent=5 // pred_check_branch
        %125 = sbr.rel (%p122) target = $region12
      $region11: #{_forward.2} parent=5 // pred_region
        %s126 = ssub.s32 %s18, 1
        // Predicated region
        $region13: #{_forward.2} parent=11 // pred_check
          %p127 = pneg %p65
        $region14: #{_forward.2} parent=11 // pred_check_branch
          %129 = sbr.rel (%p127) target = $region16
        $region15: #{_forward.2} parent=11 // pred_region
          _
        $region16: #{_forward.2} parent=11 // pred_fallthru
          _
        // Predicated region
        $region17: #{_forward.2} parent=11 // pred_check
          %p130 = pneg %p86
        $region18: #{_forward.2} parent=11 // pred_check_branch
          %132 = sbr.rel (%p130) target = $region20
        $region19: #{_forward.2} parent=11 // pred_region
          _
        $region20: #{_forward.2} parent=11 // pred_fallthru
          _
      $region12: #{_forward.2} parent=5 // pred_fallthru
        _
      %p133 = scmp.lt.s32.totalorder %s18, 2
      // Predicated region
      $region21: #{_forward.2} parent=5 // pred_check
        %p134 = pneg %p133
      $region22: #{_forward.2} parent=5 // pred_check_branch
        %136 = sbr.rel (%p134) target = $region24
      $region23: #{_forward.2} parent=5 // pred_region
        // Predicated region
        $region25: #{_forward.2} parent=23 // pred_check
          %p137 = pneg %p38
        $region26: #{_forward.2} parent=23 // pred_check_branch
          %139 = sbr.rel (%p137) target = $region28
        $region27: #{_forward.2} parent=23 // pred_region
          %s140 = smul.u32 2, %s18
          %p141 = scmp.lt.s32.totalorder %s140, 3
          %s142 = scalar_select %p141, %s140, 3
          %s143 = smul.addr %s142, 2
          %s144 = smul.addr %s143, 4
          %s145 = scalar_lea.vmem %s2, %s144
          %s146 = smul.u32 2, %s18
        $region28: #{_forward.2} parent=23 // pred_fallthru
          _
      $region24: #{_forward.2} parent=5 // pred_fallthru
        _
      %p147 = scmp.le.s32.totalorder 1, %s18
      %p148 = scmp.lt.s32.totalorder %s18, 3
      %p149 = pnand %p147, %p148
      %p150 = pneg %p149
      // Predicated region
      $region29: #{_forward.2} parent=5 // pred_check
        _
      $region30: #{_forward.2} parent=5 // pred_check_branch
        %152 = sbr.rel (%p149) target = $region32
      $region31: #{_forward.2} parent=5 // pred_region
        #allocation9 [shape = 'u8[8192]{0}', space=vmem, size = 0x2000, dematerialized = true, scoped, tag = 'FusionAdapter Buffer %fusion.1 = bf16[32,256]{1,0:T(8,128)(2,1)} fusion(%param_2.1, %param_3), kind=kLoop, calls=%fused_computation.1.clone, metadata={op_name="jit(_forward)/jit(_pad)/pad" stack_frame_id=16}']
        %s153 = ssub.s32 %s18, 1
        %s154 = smul.u32 2, %s23
        %p155 = scmp.lt.s32.totalorder %s154, 3
        %s156 = scalar_select %p155, %s154, 3
        %s157 = smul.addr %s156, 2
        %s158 = smul.addr %s157, 4
        %s159 = scalar_lea.vmem %s2, %s158
        %p160 = pneg %p44
        %p161 = pneg %p41
        %p162 = pneg %p65
        %p163 = pneg %p62
        %p164 = pneg %p86
        %p165 = pneg %p83
        %p166 = pneg %p112
        %p167 = pneg %p109
        %s168 = sand.u32 %s99, 1
        %s169 = scalar_lea.sflag [#allocation8], %s168
        %s170 = sand.u32 %s99, 1
        %s171 = smul.addr %s170, 8
        %s172 = scalar_lea.vmem [#allocation7], %s171
        %s173 = smul.u32 2, %s23
        %p174 = scmp.lt.s32.totalorder %s173, 3
        %s175 = scalar_select %p174, %s173, 3
        %s176 = smul.addr %s175, 2
        %s177 = smul.addr %s176, 4
        %s178 = scalar_lea.vmem %s2, %s177
        %s179 = smul.u32 2, %s23
        %s180 = smul.u32 2, %s23
        %v181 = vld [vmem:[%s178] sm:$0xf]
        %v182 = vunpack.c.l.bf16 %v181
        %v183 = vunpack.c.h.bf16 %v181
        %v184 = vlaneseq
        %v185 = vand.u32 %v184, 127
        %vm187 = vcmp.lt.s32.totalorder %v185, 196
        %v188 = vsel %vm187, %v182, %v10
        %v189 = vpack.c.bf16 0.0, %v188
        %s191 = ssub.s32 16, 1
        %192 = vst [vmem:[#allocation9] sm:%s191] %v189
        %s193 = scalar_lea.vmem %s178, 4
        %s195 = sor.u32 255, 127
        %s196 = sand.u32 %s195, 85
        %s197 = sshrl.u32 %s196, 1
        %s198 = sor.u32 %s196, %s197
        %s199 = sand.u32 51, %s198
        %s200 = sshrl.u32 %s199, 2
        %s201 = sor.u32 %s199, %s200
        %s202 = sand.u32 15, %s201
        %v203 = vld [vmem:[%s193] sm:%s202]
        %v204 = vunpack.c.l.bf16 %v203
        %v205 = vunpack.c.h.bf16 %v203
        %v206 = vlaneseq
        %v207 = vand.u32 %v206, 127
        %v208 = vadd.s32 %v207, 128
        %vm209 = vcmp.lt.s32.totalorder %v208, 196
        %v210 = vsel %vm209, %v204, %v10
        %s211 = scalar_lea.vmem [#allocation9], 4
        %v212 = vpack.c.bf16 0.0, %v210
        %s214 = ssub.s32 16, 1
        %215 = vst [vmem:[%s211] sm:%s214] %v212
        %s216 = scalar_lea.vmem %s178, 8
        %v217 = vld [vmem:[%s216] sm:$0xf]
        %v218 = vunpack.c.l.bf16 %v217
        %v219 = vunpack.c.h.bf16 %v217
        %v220 = vlaneseq
        %v221 = vand.u32 %v220, 127
        %vm223 = vcmp.lt.s32.totalorder %v221, 196
        %v224 = vsel %vm223, %v218, %v10
        %s225 = scalar_lea.vmem [#allocation9], 8
        %v226 = vpack.c.bf16 0.0, %v224
        %s228 = ssub.s32 16, 1
        %229 = vst [vmem:[%s225] sm:%s228] %v226
        %s230 = scalar_lea.vmem %s178, 12
        %s232 = sor.u32 255, 127
        %s233 = sand.u32 %s232, 85
        %s234 = sshrl.u32 %s233, 1
        %s235 = sor.u32 %s233, %s234
        %s236 = sand.u32 51, %s235
        %s237 = sshrl.u32 %s236, 2
        %s238 = sor.u32 %s236, %s237
        %s239 = sand.u32 15, %s238
        %v240 = vld [vmem:[%s230] sm:%s239]
        %v241 = vunpack.c.l.bf16 %v240
        %v242 = vunpack.c.h.bf16 %v240
        %v243 = vlaneseq
        %v244 = vand.u32 %v243, 127
        %v245 = vadd.s32 %v244, 128
        %vm246 = vcmp.lt.s32.totalorder %v245, 196
        %v247 = vsel %vm246, %v241, %v10
        %s248 = scalar_lea.vmem [#allocation9], 12
        %v249 = vpack.c.bf16 0.0, %v247
        %s251 = ssub.s32 16, 1
        %252 = vst [vmem:[%s248] sm:%s251] %v249
        %v254 = vld [vmem:[#allocation9] sm:$0xff]
        %v255 = vld [vmem:[#allocation9 + $0x8] sm:$0xff]
        %v256 = vld [vmem:[%s0] sm:$0xf]
        %v257 = vld [vmem:[%s0 + $0x4] sm:$0xf]
        %v258 = vld [vmem:[%s0 + $0x8] sm:$0xf]
        %v259 = vld [vmem:[%s0 + $0xc] sm:$0xf]
        %v260 = vld [vmem:[%s0 + $0x10] sm:$0xf]
        %v261 = vld [vmem:[%s0 + $0x14] sm:$0xf]
        %v262 = vld [vmem:[%s0 + $0x18] sm:$0xf]
        %v263 = vld [vmem:[%s0 + $0x1c] sm:$0xf]
        %v264 = vld [vmem:[%s0 + $0x20] sm:$0xf]
        %v265 = vld [vmem:[%s0 + $0x24] sm:$0xf]
        %v266 = vld [vmem:[%s0 + $0x28] sm:$0xf]
        %v267 = vld [vmem:[%s0 + $0x2c] sm:$0xf]
        %v268 = vld [vmem:[%s0 + $0x30] sm:$0xf]
        %v269 = vld [vmem:[%s0 + $0x34] sm:$0xf]
        %v270 = vld [vmem:[%s0 + $0x38] sm:$0xf]
        %v271 = vld [vmem:[%s0 + $0x3c] sm:$0xf]
        %v272 = vld [vmem:[%s0 + $0x40] sm:$0xf]
        %v273 = vld [vmem:[%s0 + $0x44] sm:$0xf]
        %v274 = vld [vmem:[%s0 + $0x48] sm:$0xf]
        %v275 = vld [vmem:[%s0 + $0x4c] sm:$0xf]
        %v276 = vld [vmem:[%s0 + $0x50] sm:$0xf]
        %v277 = vld [vmem:[%s0 + $0x54] sm:$0xf]
        %v278 = vld [vmem:[%s0 + $0x58] sm:$0xf]
        %v279 = vld [vmem:[%s0 + $0x5c] sm:$0xf]
        %v280 = vld [vmem:[%s0 + $0x60] sm:$0xf]
        %v281 = vld [vmem:[%s0 + $0x64] sm:$0xf]
        %v282 = vld [vmem:[%s0 + $0x68] sm:$0xf]
        %v283 = vld [vmem:[%s0 + $0x6c] sm:$0xf]
        %v284 = vld [vmem:[%s0 + $0x70] sm:$0xf]
        %v285 = vld [vmem:[%s0 + $0x74] sm:$0xf]
        %v286 = vld [vmem:[%s0 + $0x78] sm:$0xf]
        %v287 = vld [vmem:[%s0 + $0x7c] sm:$0xf]
        %v288 = vld [vmem:[%s1] sm:$0x1]
        %v289 = vlaneseq
        %v290 = vshrl.u32 %v289, 7
        %v291 = vsub.s32 0, %v290
        %v292 = vrot.slane %v288, %v291
        %v295 = vunpack.c.l.b16 %v254
        %v296 = vunpack.c.h.b16 %v254
        %v297 = vunpack.c.l.b16 %v255
        %v298 = vunpack.c.h.b16 %v255
        %v299 = vpack.c.b16 %v297, %v295
        %v300 = vpack.c.b16 %v298, %v296
        %v335 = vunpack.c.l.b16 %v256
        %v336 = vunpack.c.l.b16 %v257
        %v337 = vunpack.c.l.b16 %v258
        %v338 = vunpack.c.l.b16 %v259
        %v339 = vunpack.c.l.b16 %v260
        %v340 = vunpack.c.l.b16 %v261
        %v341 = vunpack.c.l.b16 %v262
        %v342 = vunpack.c.l.b16 %v263
        %v343 = vunpack.c.l.b16 %v264
        %v344 = vunpack.c.l.b16 %v265
        %v345 = vunpack.c.l.b16 %v266
        %v346 = vunpack.c.l.b16 %v267
        %v347 = vunpack.c.l.b16 %v268
        %v348 = vunpack.c.l.b16 %v269
        %v349 = vunpack.c.l.b16 %v270
        %v350 = vunpack.c.l.b16 %v271
        %v351 = vunpack.c.l.b16 %v272
        %v352 = vunpack.c.l.b16 %v273
        %v353 = vunpack.c.l.b16 %v274
        %v354 = vunpack.c.l.b16 %v275
        %v355 = vunpack.c.l.b16 %v276
        %v356 = vunpack.c.l.b16 %v277
        %v357 = vunpack.c.l.b16 %v278
        %v358 = vunpack.c.l.b16 %v279
        %v359 = vunpack.c.l.b16 %v280
        %v360 = vunpack.c.l.b16 %v281
        %v361 = vunpack.c.l.b16 %v282
        %v362 = vunpack.c.l.b16 %v283
        %v363 = vunpack.c.l.b16 %v284
        %v364 = vunpack.c.l.b16 %v285
        %v365 = vunpack.c.l.b16 %v286
        %v366 = vunpack.c.l.b16 %v287
        %v367 = vpack.c.b16 %v336, %v335
        %v368 = vpack.c.b16 %v338, %v337
        %v369 = vpack.c.b16 %v340, %v339
        %v370 = vpack.c.b16 %v342, %v341
        %v371 = vpack.c.b16 %v344, %v343
        %v372 = vpack.c.b16 %v346, %v345
        %v373 = vpack.c.b16 %v348, %v347
        %v374 = vpack.c.b16 %v350, %v349
        %v375 = vpack.c.b16 %v352, %v351
        %v376 = vpack.c.b16 %v354, %v353
        %v377 = vpack.c.b16 %v356, %v355
        %v378 = vpack.c.b16 %v358, %v357
        %v379 = vpack.c.b16 %v360, %v359
        %v380 = vpack.c.b16 %v362, %v361
        %v381 = vpack.c.b16 %v364, %v363
        %v382 = vpack.c.b16 %v366, %v365
        %399 = vmatprep.subr.bf16.mxu0 0
        %400 = vmatpush1.bf16.msra.mxu0 %v374
        %401 = vmatprep.subr.bf16.mxu0 0
        %402 = vmatpush1.bf16.msra.mxu0 %v373
        %403 = vmatprep.subr.bf16.mxu0 0
        %404 = vmatpush1.bf16.msra.mxu0 %v372
        %405 = vmatprep.subr.bf16.mxu0 0
        %406 = vmatpush1.bf16.msra.mxu0 %v371
        %407 = vmatprep.subr.bf16.mxu0 0
        %408 = vmatpush1.bf16.msra.mxu0 %v370
        %409 = vmatprep.subr.bf16.mxu0 0
        %410 = vmatpush1.bf16.msra.mxu0 %v369
        %411 = vmatprep.subr.bf16.mxu0 0
        %412 = vmatpush1.bf16.msra.mxu0 %v368
        %413 = vmatprep.subr.bf16.mxu0 0
        %414 = vmatpush1.bf16.msra.mxu0 %v367
        %415 = vmatprep.subr.bf16.mxu0 0
        %416 = vmatpush2.bf16.msra.mxu0 %v382
        %417 = vmatprep.subr.bf16.mxu0 0
        %418 = vmatpush2.bf16.msra.mxu0 %v381
        %419 = vmatprep.subr.bf16.mxu0 0
        %420 = vmatpush2.bf16.msra.mxu0 %v380
        %421 = vmatprep.subr.bf16.mxu0 0
        %422 = vmatpush2.bf16.msra.mxu0 %v379
        %423 = vmatprep.subr.bf16.mxu0 0
        %424 = vmatpush2.bf16.msra.mxu0 %v378
        %425 = vmatprep.subr.bf16.mxu0 0
        %426 = vmatpush2.bf16.msra.mxu0 %v377
        %427 = vmatprep.subr.bf16.mxu0 0
        %428 = vmatpush2.bf16.msra.mxu0 %v376
        %429 = vmatprep.subr.bf16.mxu0 0
        %430 = vmatpush2.bf16.msra.mxu0 %v375
        %431 = vmatprep.mubr.bf16.mxu0 %v300
        %432 = vmatmul.mubr.bf16.gmra.mxu0 %v299
        %v433 = vpop.f32.mrf.mxu0
        %v434 = vadd.f32 %v292, %v433
        %v435 = vpop.f32.mrf.mxu0
        %v436 = vpop.f32.mrf.mxu0
        %v437 = vadd.f32 %v292, %v436
        %v438 = vpop.f32.mrf.mxu0
        %439 = vdwg.mxu0
        %440 = vadd.xlane.f32.xlu0 %v434
        %v441 = vpop.xlane.xlu0 %440
        %442 = vadd.xlane.f32.xlu0 %v437
        %v443 = vpop.xlane.xlu0 %442
        %v444 = vmul.f32 %v441, 0.03125
        %v445 = vmul.f32 %v443, 0.03125
        %v446 = vsub.f32 %v434, %v444
        %v447 = vsub.f32 %v437, %v445
        %v448 = vmul.f32 %v446, %v446
        %v449 = vmul.f32 %v447, %v447
        %450 = vadd.xlane.f32.xlu0 %v448
        %v451 = vpop.xlane.xlu0 %450
        %452 = vadd.xlane.f32.xlu0 %v449
        %v453 = vpop.xlane.xlu0 %452
        %v454 = vmul.f32 %v444, %v444
        %v455 = vmul.f32 %v445, %v445
        %v456 = vmul.f32 %v454, 96.0
        %v457 = vmul.f32 %v455, 96.0
        %v458 = vsub.f32 %v451, %v456
        %v459 = vsub.f32 %v453, %v457
        %v460 = vmul.f32 %v458, 0.03125
        %v461 = vmul.f32 %v459, 0.03125
        %v462 = vadd.f32 %v460, 1e-05
        %v463 = vadd.f32 %v461, 1e-05
        %v464 = vrsqrt.pop %v462
        %v465 = vrsqrt.pop %v463
        %v466 = vmul.f32 %v446, %v464
        %v467 = vmul.f32 %v447, %v465
        %v468 = vld [vmem:[%s1 + $0x1] sm:$0x1]
        %v469 = vlaneseq
        %v470 = vshrl.u32 %v469, 7
        %v471 = vsub.s32 0, %v470
        %v472 = vrot.slane %v468, %v471
        %v473 = vmul.f32 %v466, %v472
        %v474 = vmul.f32 %v467, %v472
        %v475 = vld [vmem:[%s1 + $0x2] sm:$0x1]
        %v476 = vlaneseq
        %v477 = vshrl.u32 %v476, 7
        %v478 = vsub.s32 0, %v477
        %v479 = vrot.slane %v475, %v478
        %v480 = vadd.f32 %v473, %v479
        %v481 = vadd.f32 %v474, %v479
        %v482 = vpack.c.bf16 %v481, %v480
        %v484 = vunpack.c.l.b16 %v482
        %v485 = vunpack.c.h.b16 %v482
        %v486 = vpack.c.b16 %v484, %v484
        %v487 = vpack.c.b16 %v485, %v485
        %490 = vst [vmem:[%s172] sm:$0xf] %v486
        %491 = vst [vmem:[%s172 + $0x4] sm:$0xf] %v487
        %s492 = sand.u32 %s99, 1
        %s493 = scalar_lea.sflag [#allocation8], %s492
        %s494 = sand.u32 %s99, 1
        %s495 = smul.addr %s494, 8
        %s496 = scalar_lea.vmem [#allocation7], %s495
        // Predicated region
        $region33: #{_forward.2} parent=31 // pred_check
          %p497 = pneg %p109
        $region34: #{_forward.2} parent=31 // pred_check_branch
          %499 = sbr.rel (%p497) target = $region36
        $region35: #{_forward.2} parent=31 // pred_region
          %s500 = smul.u32 2, %s23
          %s502 = ssub.s32 128, 128
          %503 = vsyncadd %s493, %s502
          %s504 = smul.addr %s500, 64
          %s505 = scalar_lea.hbm %s4, %s504
          %s506 = sshll.u32 %s496, 4
          %s507 = int_to_ptr.vmem [resolvable:$true] %s506
          %512 = dma.vmem_to_hbm [thread:$0]  %s507, 128, %s505, %s493, 64, 64, 4
        $region36: #{_forward.2} parent=31 // pred_fallthru
          _
      $region32: #{_forward.2} parent=5 // pred_fallthru
        _
      %p513 = scmp.le.s32.totalorder 2, %s18
      // Predicated region
      $region37: #{_forward.2} parent=5 // pred_check
        %p514 = pneg %p513
      $region38: #{_forward.2} parent=5 // pred_check_branch
        %516 = sbr.rel (%p514) target = $region40
      $region39: #{_forward.2} parent=5 // pred_region
        %s517 = ssub.s32 %s18, 2
        // Predicated region
        $region41: #{_forward.2} parent=39 // pred_check
          %p518 = pneg %p115
        $region42: #{_forward.2} parent=39 // pred_check_branch
          %520 = sbr.rel (%p518) target = $region44
        $region43: #{_forward.2} parent=39 // pred_region
          %s521 = sand.u32 %s100, 1
          %s522 = scalar_lea.sflag [#allocation8], %s521
          %s523 = sand.u32 %s100, 1
          %s524 = smul.addr %s523, 8
          %s525 = scalar_lea.vmem [#allocation7], %s524
          %526 = dma.done %s522, 128
        $region44: #{_forward.2} parent=39 // pred_fallthru
          _
      $region40: #{_forward.2} parent=5 // pred_fallthru
        _
    $region6: #{_forward.2} parent=1 // loop_footer
      %s22 = sadd.s32 1, %s18
    $region7: #{_forward.2} parent=1 // loop_footer_branch
      %17 = sbr.rel target = $region3
    $region8: #{_forward.2} parent=1 // loop_exit
      _
    %527 = vsyncpa [#allocation8], 1
    %s528 = scalar_lea.sflag [#allocation8], 1
    %529 = vsyncpa %s528, 1

</llo_original>
